<compile_context>
chip_gen: v7x
topology: tpu7x:2x2x1
jax: 0.10.0
libtpu: 0.0.40
codegen_flags: <defaults>
</compile_context>

<pallas_src>
import jax
import jax.numpy as jnp
from jax.experimental import pallas as pl
from jax.experimental.pallas import tpu as pltpu

# dtype fed to the one-hot gather/scatter matmuls. float32 matches the f32
# reference within 1e-4. On v6e/v7x set to jnp.bfloat16 for ~2-3x on the
# dominant [TE,N]x[N,*] MXU work (one-hots are exact in bf16, the payload is
# rounded -> validate with a relaxed tolerance). Accumulation stays f32.
_MXU_DTYPE = jnp.float32


def _painn_message_kernel(
    idx_i_ref,    # [1, TE]    int32  scatter target per edge (pad value = N)
    idx_j_ref,    # [TE, 1]    int32  gather source per edge  (pad value = N)
    rel_dir_ref,  # [3, TE, 1] f32    edge directions, component-major
    rdc_ref,      # [TE, 1]    f32    cosine-cut distances
    rbf_ref,      # [TE, R]    f32
    nodes_ref,    # [N, 4F]    f32    [s | v_x | v_y | v_z]
    w1_ref, b1_ref, w2_ref, b2_ref, wr_ref, br_ref,
    out_ref,      # [N, 4F]    f32    resident accumulator -> final node slab
    slab_ref,     # scratch [N, 6F] f32  [phi_vv | phi_ss | phi_vs | v_x | v_y | v_z]
    cnt_ref,      # scratch [N, 1]  f32  bincount(idx_i)
):
    t = pl.program_id(0)
    n_t = pl.num_programs(0)
    TE = idx_j_ref.shape[0]
    N, F4 = nodes_ref.shape
    F = F4 // 4

    # ---- once per kernel: scalar_network + gather-slab build, zero accums ---
    @pl.when(t == 0)
    def _init():
        s = nodes_ref[:, :F]
        h = jnp.dot(s, w1_ref[...], preferred_element_type=jnp.float32) + b1_ref[...]
        h = h * jax.nn.sigmoid(h)                                    # SiLU
        phi = jnp.dot(h, w2_ref[...], preferred_element_type=jnp.float32) + b2_ref[...]
        # One full-width store: [phi(3F) | packed v(3F)].
        slab_ref[...] = jnp.concatenate([phi, nodes_ref[:, F:]], axis=1)
        out_ref[...] = jnp.zeros_like(out_ref)
        cnt_ref[...] = jnp.zeros_like(cnt_ref)

    # ---- per-edge filter weights: rbf_network scaled by cutoff --------------
    W = jnp.dot(rbf_ref[...], wr_ref[...], preferred_element_type=jnp.float32) + br_ref[...]
    W = W * rdc_ref[...]                                             # [TE, 3F]

    # ---- one-hot operands (padded edges with idx == N give all-zero rows) ---
    hit_j = jax.lax.broadcasted_iota(jnp.int32, (TE, N), 1) == idx_j_ref[...]
    hit_iT = jax.lax.broadcasted_iota(jnp.int32, (N, TE), 0) == idx_i_ref[...]
    oh_j = hit_j.astype(_MXU_DTYPE)                                  # [TE, N]
    oh_iT = hit_iT.astype(_MXU_DTYPE)                                # [N, TE]

    # ---- fused gather: [phi | v][idx_j] in a single MXU pass ----------------
    gath = jnp.dot(oh_j, slab_ref[...].astype(_MXU_DTYPE),
                   preferred_element_type=jnp.float32)               # [TE, 6F]
    phi_W = gath[:, :3 * F] * W                                      # [TE, 3F]
    vv = phi_W[:, 0 * F:1 * F]
    ss = phi_W[:, 1 * F:2 * F]
    vs = phi_W[:, 2 * F:3 * F]

    per_edge = [ss]
    for d in range(3):
        v_j_d = gath[:, (3 + d) * F:(4 + d) * F]                     # v_d[idx_j]
        per_edge.append(v_j_d * vv + vs * rel_dir_ref[d])            # [TE, F]
    scat = jnp.concatenate(per_edge, axis=1)                         # [TE, 4F]

    # ---- fused scatter-add over idx_i; counts via cross-lane reduce ---------
    out_ref[...] += jnp.dot(oh_iT, scat.astype(_MXU_DTYPE),
                            preferred_element_type=jnp.float32)      # [N, 4F]
    cnt_ref[...] += jnp.sum(oh_iT.astype(jnp.float32), axis=1, keepdims=True)

    # ---- once per kernel: normalize and add residuals -----------------------
    @pl.when(t == n_t - 1)
    def _finalize():
        # Precondition: every node appears in idx_i (torch would produce
        # inf/nan here too for zero-degree nodes).
        inv = 1.0 / cnt_ref[...]                                     # [N, 1]
        out_ref[...] = nodes_ref[...] + out_ref[...] * inv


def _choose_edge_tile(num_edges: int, num_nodes: int, num_features: int,
                      num_rbf: int) -> int:
    """Edge-tile size. Single tile for small graphs; otherwise a multiple of
    128 (required by the lane axis of the [1, E] scatter-index block), shrunk
    so the per-tile one-hot / per-edge temporaries stay modest (v7x has half
    the VMEM of v5e/v6e)."""
    if num_edges <= 512:
        return max(8, -(-num_edges // 8) * 8)
    te = 512
    # [TE,N]+[N,TE] one-hots plus ~16F-wide per-edge temporaries.
    while te > 128 and 4 * te * (2 * num_nodes + 16 * num_features + num_rbf) > (12 << 20):
        te //= 2
    return te


def painn_message_block(idx_i, idx_j, rel_dir, rel_dist_cut, rbf_features,
                        scalar_features, vector_features, params):
    """Pallas implementation of PaiNNMessageBlock.forward.

    PyTorch layouts in / out:
      idx_i, idx_j: [E] int, rel_dir: [E,3], rel_dist_cut: [E],
      rbf_features: [E,R], scalar_features: [N,F], vector_features: [N,F,3].
    Returns (scalar_features [N,F], vector_features [N,F,3]).
    """
    w1, b1, w2, b2, wr, br = params
    f32 = jnp.float32
    N, F = scalar_features.shape
    E = idx_i.shape[0]
    R = rbf_features.shape[-1]

    TE = _choose_edge_tile(E, N, F, R)
    n_tiles = -(-E // TE)
    E_pad = n_tiles * TE
    pad = E_pad - E

    idx_i = idx_i.astype(jnp.int32)
    idx_j = idx_j.astype(jnp.int32)
    rel_dir = rel_dir.astype(f32)
    rel_dist_cut = rel_dist_cut.astype(f32)
    rbf_features = rbf_features.astype(f32)
    if pad:
        # Padded edges point at node index N, which no one-hot row matches,
        # so they contribute nothing to the scatters or the counts.
        idx_i = jnp.concatenate([idx_i, jnp.full((pad,), N, jnp.int32)])
        idx_j = jnp.concatenate([idx_j, jnp.full((pad,), N, jnp.int32)])
        rel_dir = jnp.concatenate([rel_dir, jnp.zeros((pad, 3), f32)])
        rel_dist_cut = jnp.concatenate([rel_dist_cut, jnp.zeros((pad,), f32)])
        rbf_features = jnp.concatenate([rbf_features, jnp.zeros((pad, R), f32)])

    idx_i_k = idx_i.reshape(1, E_pad)
    idx_j_k = idx_j.reshape(E_pad, 1)
    rel_dir_k = rel_dir.T.reshape(3, E_pad, 1)          # component-major
    rdc_k = rel_dist_cut.reshape(E_pad, 1)

    # Lane-dense node slab [N, 4F] = [s | v_x | v_y | v_z].
    v_flat = jnp.transpose(vector_features.astype(f32), (0, 2, 1)).reshape(N, 3 * F)
    nodes = jnp.concatenate([scalar_features.astype(f32), v_flat], axis=1)

    # ---- cost estimate & VMEM budget ----------------------------------------
    flops = (2 * N * F * F + 2 * N * F * 3 * F           # scalar_network
             + 2 * E_pad * R * 3 * F                     # rbf_network
             + 2 * E_pad * N * 6 * F                     # fused gather
             + 2 * E_pad * N * 4 * F                     # fused scatter
             + 12 * E_pad * F)                           # edge-wise products
    bytes_accessed = 4 * (E_pad * (R + 7) + 3 * N * 4 * F
                          + F * F + F * 3 * F + R * 3 * F + 7 * F)
    cost = pl.CostEstimate(flops=int(flops), transcendentals=int(N * F),
                           bytes_accessed=int(bytes_accessed))

    tile_bytes = 4 * TE * (R + 8)                                    # streamed edge blocks
    resident_bytes = 4 * (3 * N * 4 * F + N * 6 * F + N              # nodes/out/slab/cnt
                          + F * F + F * 3 * F + R * 3 * F + 7 * F)   # weights
    temp_bytes = 4 * (2 * TE * N + TE * (6 * F + 2 * 3 * F + 4 * F))
    vmem_limit = int(min(max(2 * (2 * tile_bytes + resident_bytes + temp_bytes),
                             32 << 20), 64 << 20))
    # TODO(synk): for N*F large enough that the resident node slabs exceed
    # VMEM, the node axis would also need tiling (two-level scatter).

    grid_spec = pltpu.PrefetchScalarGridSpec(
        num_scalar_prefetch=0,
        grid=(n_tiles,),
        in_specs=[
            pl.BlockSpec((1, TE), lambda t: (0, t)),            # idx_i
            pl.BlockSpec((TE, 1), lambda t: (t, 0)),            # idx_j
            pl.BlockSpec((3, TE, 1), lambda t: (0, t, 0)),      # rel_dir
            pl.BlockSpec((TE, 1), lambda t: (t, 0)),            # rel_dist_cut
            pl.BlockSpec((TE, R), lambda t: (t, 0)),            # rbf
            pl.BlockSpec((N, 4 * F), lambda t: (0, 0)),         # node slab
            pl.BlockSpec((F, F), lambda t: (0, 0)),             # w1
            pl.BlockSpec((1, F), lambda t: (0, 0)),             # b1
            pl.BlockSpec((F, 3 * F), lambda t: (0, 0)),         # w2
            pl.BlockSpec((1, 3 * F), lambda t: (0, 0)),         # b2
            pl.BlockSpec((R, 3 * F), lambda t: (0, 0)),         # wr
            pl.BlockSpec((1, 3 * F), lambda t: (0, 0)),         # br
        ],
        out_specs=pl.BlockSpec((N, 4 * F), lambda t: (0, 0)),
        scratch_shapes=[
            pltpu.VMEM((N, 6 * F), jnp.float32),                # gather slab
            pltpu.VMEM((N, 1), jnp.float32),                    # counts
        ],
    )

    out = pl.pallas_call(
        _painn_message_kernel,
        out_shape=jax.ShapeDtypeStruct((N, 4 * F), jnp.float32),
        grid_spec=grid_spec,
        compiler_params=pltpu.CompilerParams(
            dimension_semantics=("arbitrary",),   # resident accumulator axis
            vmem_limit_bytes=vmem_limit),
        cost_estimate=cost,
    )(idx_i_k, idx_j_k, rel_dir_k, rdc_k, rbf_features, nodes,
      w1, b1, w2, b2, wr, br)

    s_out = out[:, :F]
    v_out = jnp.transpose(out[:, F:].reshape(N, 3, F), (0, 2, 1))
    return s_out, v_out


def _reference(idx_i, idx_j, rel_dir, rel_dist_cut, rbf, s, v, params):
    """Pure-JAX reference matching the PyTorch forward."""
    w1, b1, w2, b2, wr, br = params
    N = s.shape[0]
    h = s @ w1 + b1
    h = h * jax.nn.sigmoid(h)
    phi = h @ w2 + b2
    W = (rbf @ wr + br) * rel_dist_cut[:, None]
    phi_W = phi[idx_j] * W
    vv, ss, vs = jnp.split(phi_W, 3, axis=-1)
    counts = jax.ops.segment_sum(jnp.ones_like(idx_i, dtype=jnp.float32),
                                 idx_i, num_segments=N)
    scal_res = jax.ops.segment_sum(ss, idx_i, num_segments=N) / counts[:, None]
    per_edge = v[idx_j] * vv[:, :, None] + vs[:, :, None] * rel_dir[:, None, :]
    vec_res = jax.ops.segment_sum(per_edge, idx_i, num_segments=N) / counts[:, None, None]
    return s + scal_res, v + vec_res


if __name__ == "__main__":
    # Small deterministic problem sizes.
    N = 8          # num_nodes
    E = 16         # num_edges
    F = 32         # num_features
    R = 16         # num_rbf_features

    key = jax.random.PRNGKey(0)
    keys = jax.random.split(key, 12)

    # Edges: every node appears in idx_i (matches torch.bincount / division
    # semantics without zero counts).
    idx_i = jnp.concatenate([jnp.arange(N, dtype=jnp.int32),
                             jnp.arange(N, dtype=jnp.int32)])
    idx_j = jnp.concatenate([(jnp.arange(N, dtype=jnp.int32) + 1) % N,
                             (jnp.arange(N, dtype=jnp.int32) + 3) % N])

    rel_dir = jax.random.normal(keys[0], (E, 3), jnp.float32)
    rel_dir = rel_dir / jnp.linalg.norm(rel_dir, axis=-1, keepdims=True)
    rel_dist_cut = jax.random.uniform(keys[1], (E,), jnp.float32)
    rbf_features = jax.random.normal(keys[2], (E, R), jnp.float32)
    scalar_features = jax.random.normal(keys[3], (N, F), jnp.float32)
    vector_features = jax.random.normal(keys[4], (N, F, 3), jnp.float32)

    # Deterministic parameter init (shapes from the module's __init__):
    #   scalar_network = Linear(F,F) -> SiLU -> Linear(F, 3F)
    #   rbf_network    = Linear(R, 3F)
    # Weights are stored in [in, out] layout (y = x @ W + b).
    w1 = 0.1 * jax.random.normal(keys[5], (F, F), jnp.float32)
    b1 = 0.1 * jax.random.normal(keys[6], (1, F), jnp.float32)
    w2 = 0.1 * jax.random.normal(keys[7], (F, 3 * F), jnp.float32)
    b2 = 0.1 * jax.random.normal(keys[8], (1, 3 * F), jnp.float32)
    wr = 0.1 * jax.random.normal(keys[9], (R, 3 * F), jnp.float32)
    br = 0.1 * jax.random.normal(keys[10], (1, 3 * F), jnp.float32)
    params = (w1, b1, w2, b2, wr, br)

    s_out, v_out = painn_message_block(idx_i, idx_j, rel_dir, rel_dist_cut,
                                       rbf_features, scalar_features,
                                       vector_features, params)
    jax.block_until_ready((s_out, v_out))

    s_ref, v_ref = _reference(idx_i, idx_j, rel_dir, rel_dist_cut,
                              rbf_features, scalar_features,
                              vector_features, params)

    assert s_out.shape == (N, F) and v_out.shape == (N, F, 3)
    assert jnp.allclose(s_out, s_ref, atol=1e-4, rtol=1e-4)
    assert jnp.allclose(v_out, v_ref, atol=1e-4, rtol=1e-4)

    print("KERNEL_OK")
</pallas_src>

<mosaic_0001>
module attributes {stable_mosaic.version = 11 : i64} {
  func.func @_painn_message_kernel(%arg0: i32, %arg1: memref<1x16xi32, #tpu.memory_space<vmem>>, %arg2: memref<16x1xi32, #tpu.memory_space<vmem>>, %arg3: memref<3x16x1xf32, #tpu.memory_space<vmem>>, %arg4: memref<16x1xf32, #tpu.memory_space<vmem>>, %arg5: memref<16x16xf32, #tpu.memory_space<vmem>>, %arg6: memref<8x128xf32, #tpu.memory_space<vmem>>, %arg7: memref<32x32xf32, #tpu.memory_space<vmem>>, %arg8: memref<1x32xf32, #tpu.memory_space<vmem>>, %arg9: memref<32x96xf32, #tpu.memory_space<vmem>>, %arg10: memref<1x96xf32, #tpu.memory_space<vmem>>, %arg11: memref<16x96xf32, #tpu.memory_space<vmem>>, %arg12: memref<1x96xf32, #tpu.memory_space<vmem>>, %arg13: memref<8x128xf32, #tpu.memory_space<vmem>>, %arg14: memref<8x192xf32, #tpu.memory_space<vmem>>, %arg15: memref<8x1xf32, #tpu.memory_space<vmem>>) attributes {dimension_semantics = [#tpu.dimension_semantics<arbitrary>], iteration_bounds = array<i64: 1>, scalar_prefetch = 0 : i64, scratch_operands = 2 : i64, tpu.core_type = #tpu.core_type<tc>, window_params = [{transform_indices = @transform_0, window_bounds = array<i64: 1, 16>}, {transform_indices = @transform_1, window_bounds = array<i64: 16, 1>}, {transform_indices = @transform_2, window_bounds = array<i64: 3, 16, 1>}, {transform_indices = @transform_3, window_bounds = array<i64: 16, 1>}, {transform_indices = @transform_4, window_bounds = array<i64: 16, 16>}, {pipeline_mode = #tpu.pipeline_mode<synchronous>, transform_indices = @transform_5, window_bounds = array<i64: 8, 128>}, {pipeline_mode = #tpu.pipeline_mode<synchronous>, transform_indices = @transform_6, window_bounds = array<i64: 32, 32>}, {pipeline_mode = #tpu.pipeline_mode<synchronous>, transform_indices = @transform_7, window_bounds = array<i64: 1, 32>}, {pipeline_mode = #tpu.pipeline_mode<synchronous>, transform_indices = @transform_8, window_bounds = array<i64: 32, 96>}, {pipeline_mode = #tpu.pipeline_mode<synchronous>, transform_indices = @transform_9, window_bounds = array<i64: 1, 96>}, {pipeline_mode = #tpu.pipeline_mode<synchronous>, transform_indices = @transform_10, window_bounds = array<i64: 16, 96>}, {pipeline_mode = #tpu.pipeline_mode<synchronous>, transform_indices = @transform_11, window_bounds = array<i64: 1, 96>}, {pipeline_mode = #tpu.pipeline_mode<synchronous>, transform_indices = @transform_12, window_bounds = array<i64: 8, 128>}]} {
    %c0_i32 = arith.constant 0 : i32
    %0 = arith.cmpi eq, %arg0, %c0_i32 : i32
    %1 = arith.extui %0 : i1 to i32
    %c0_i32_0 = arith.constant 0 : i32
    %2 = arith.cmpi ne, %1, %c0_i32_0 : i32
    scf.if %2 {
      %c0_34 = arith.constant 0 : index
      %c0_35 = arith.constant 0 : index
      %65 = vector.load %arg6[%c0_34, %c0_35] : memref<8x128xf32, #tpu.memory_space<vmem>>, vector<8x32xf32>
      %c0_36 = arith.constant 0 : index
      %c0_37 = arith.constant 0 : index
      %66 = vector.load %arg7[%c0_36, %c0_37] : memref<32x32xf32, #tpu.memory_space<vmem>>, vector<32x32xf32>
      %cst_38 = arith.constant dense<0.000000e+00> : vector<8x32xf32>
      %67 = tpu.matmul %65, %66, %cst_38 {dimension_numbers = #tpu.dot_dimension_numbers<[1], [0], [0], [1], [0, 0, 1, 1], [], []>} : vector<8x32xf32>, vector<32x32xf32>, vector<8x32xf32> -> vector<8x32xf32>
      %c0_39 = arith.constant 0 : index
      %c0_40 = arith.constant 0 : index
      %68 = vector.load %arg8[%c0_39, %c0_40] : memref<1x32xf32, #tpu.memory_space<vmem>>, vector<1x32xf32>
      %69 = vector.broadcast %68 : vector<1x32xf32> to vector<8x32xf32>
      %70 = arith.addf %67, %69 : vector<8x32xf32>
      %71 = arith.negf %70 : vector<8x32xf32>
      %72 = math.exp %71 : vector<8x32xf32>
      %cst_41 = arith.constant 1.000000e+00 : f32
      %73 = vector.broadcast %cst_41 : f32 to vector<8x32xf32>
      %74 = arith.addf %73, %72 : vector<8x32xf32>
      %75 = arith.divf %73, %74 : vector<8x32xf32>
      %76 = arith.mulf %70, %75 : vector<8x32xf32>
      %c0_42 = arith.constant 0 : index
      %c0_43 = arith.constant 0 : index
      %77 = vector.load %arg9[%c0_42, %c0_43] : memref<32x96xf32, #tpu.memory_space<vmem>>, vector<32x96xf32>
      %cst_44 = arith.constant dense<0.000000e+00> : vector<8x96xf32>
      %78 = tpu.matmul %76, %77, %cst_44 {dimension_numbers = #tpu.dot_dimension_numbers<[1], [0], [0], [1], [0, 0, 1, 1], [], []>} : vector<8x32xf32>, vector<32x96xf32>, vector<8x96xf32> -> vector<8x96xf32>
      %c0_45 = arith.constant 0 : index
      %c0_46 = arith.constant 0 : index
      %79 = vector.load %arg10[%c0_45, %c0_46] : memref<1x96xf32, #tpu.memory_space<vmem>>, vector<1x96xf32>
      %80 = vector.broadcast %79 : vector<1x96xf32> to vector<8x96xf32>
      %81 = arith.addf %78, %80 : vector<8x96xf32>
      %c0_47 = arith.constant 0 : index
      %c32 = arith.constant 32 : index
      %82 = vector.load %arg6[%c0_47, %c32] : memref<8x128xf32, #tpu.memory_space<vmem>>, vector<8x96xf32>
      %83 = tpu.concatenate %81, %82 in 1 : vector<8x96xf32>, vector<8x96xf32> -> vector<8x192xf32>
      %c0_48 = arith.constant 0 : index
      %c0_49 = arith.constant 0 : index
      %84 = vector.load %arg14[%c0_48, %c0_49] : memref<8x192xf32, #tpu.memory_space<vmem>>, vector<8x192xf32>
      tpu.vector_store %arg14[%c0_48, %c0_49], %83 {strides = array<i32>} : memref<8x192xf32, #tpu.memory_space<vmem>>, vector<8x192xf32>,
      %cst_50 = arith.constant 0.000000e+00 : f32
      %85 = vector.broadcast %cst_50 : f32 to vector<8x128xf32>
      %c0_51 = arith.constant 0 : index
      %c0_52 = arith.constant 0 : index
      %86 = vector.load %arg13[%c0_51, %c0_52] : memref<8x128xf32, #tpu.memory_space<vmem>>, vector<8x128xf32>
      tpu.vector_store %arg13[%c0_51, %c0_52], %85 {strides = array<i32>} : memref<8x128xf32, #tpu.memory_space<vmem>>, vector<8x128xf32>,
      %cst_53 = arith.constant 0.000000e+00 : f32
      %87 = vector.broadcast %cst_53 : f32 to vector<8x1xf32>
      %c0_54 = arith.constant 0 : index
      %c0_55 = arith.constant 0 : index
      %88 = vector.load %arg15[%c0_54, %c0_55] : memref<8x1xf32, #tpu.memory_space<vmem>>, vector<8x1xf32>
      tpu.vector_store %arg15[%c0_54, %c0_55], %87 {strides = array<i32>} : memref<8x1xf32, #tpu.memory_space<vmem>>, vector<8x1xf32>,
    } else {
    }
    %c0 = arith.constant 0 : index
    %c0_1 = arith.constant 0 : index
    %3 = vector.load %arg5[%c0, %c0_1] : memref<16x16xf32, #tpu.memory_space<vmem>>, vector<16x16xf32>
    %c0_2 = arith.constant 0 : index
    %c0_3 = arith.constant 0 : index
    %4 = vector.load %arg11[%c0_2, %c0_3] : memref<16x96xf32, #tpu.memory_space<vmem>>, vector<16x96xf32>
    %cst = arith.constant dense<0.000000e+00> : vector<16x96xf32>
    %5 = tpu.matmul %3, %4, %cst {dimension_numbers = #tpu.dot_dimension_numbers<[1], [0], [0], [1], [0, 0, 1, 1], [], []>} : vector<16x16xf32>, vector<16x96xf32>, vector<16x96xf32> -> vector<16x96xf32>
    %c0_4 = arith.constant 0 : index
    %c0_5 = arith.constant 0 : index
    %6 = vector.load %arg12[%c0_4, %c0_5] : memref<1x96xf32, #tpu.memory_space<vmem>>, vector<1x96xf32>
    %7 = vector.broadcast %6 : vector<1x96xf32> to vector<16x96xf32>
    %8 = arith.addf %5, %7 : vector<16x96xf32>
    %c0_6 = arith.constant 0 : index
    %c0_7 = arith.constant 0 : index
    %9 = vector.load %arg4[%c0_6, %c0_7] : memref<16x1xf32, #tpu.memory_space<vmem>>, vector<16x1xf32>
    %10 = vector.broadcast %9 : vector<16x1xf32> to vector<16x96xf32>
    %11 = arith.mulf %8, %10 : vector<16x96xf32>
    %12 = tpu.iota {dimensions = array<i32: 1>} : vector<16x8xi32>
    %c0_8 = arith.constant 0 : index
    %c0_9 = arith.constant 0 : index
    %13 = vector.load %arg2[%c0_8, %c0_9] : memref<16x1xi32, #tpu.memory_space<vmem>>, vector<16x1xi32>
    %14 = vector.broadcast %13 : vector<16x1xi32> to vector<16x8xi32>
    %15 = arith.cmpi eq, %12, %14 : vector<16x8xi32>
    %16 = tpu.iota {dimensions = array<i32: 0>} : vector<8x16xi32>
    %c0_10 = arith.constant 0 : index
    %c0_11 = arith.constant 0 : index
    %17 = vector.load %arg1[%c0_10, %c0_11] : memref<1x16xi32, #tpu.memory_space<vmem>>, vector<1x16xi32>
    %18 = vector.broadcast %17 : vector<1x16xi32> to vector<8x16xi32>
    %19 = arith.cmpi eq, %16, %18 : vector<8x16xi32>
    %20 = arith.extui %15 : vector<16x8xi1> to vector<16x8xi32>
    %21 = arith.sitofp %20 : vector<16x8xi32> to vector<16x8xf32>
    %22 = arith.extui %19 : vector<8x16xi1> to vector<8x16xi32>
    %23 = arith.sitofp %22 : vector<8x16xi32> to vector<8x16xf32>
    %c0_12 = arith.constant 0 : index
    %c0_13 = arith.constant 0 : index
    %24 = vector.load %arg14[%c0_12, %c0_13] : memref<8x192xf32, #tpu.memory_space<vmem>>, vector<8x192xf32>
    %cst_14 = arith.constant dense<0.000000e+00> : vector<16x192xf32>
    %25 = tpu.matmul %21, %24, %cst_14 {dimension_numbers = #tpu.dot_dimension_numbers<[1], [0], [0], [1], [0, 0, 1, 1], [], []>} : vector<16x8xf32>, vector<8x192xf32>, vector<16x192xf32> -> vector<16x192xf32>
    %26 = vector.extract_strided_slice %25 {offsets = [0, 0], sizes = [16, 96], strides = [1, 1]} : vector<16x192xf32> to vector<16x96xf32>
    %27 = arith.mulf %26, %11 : vector<16x96xf32>
    %28 = vector.extract_strided_slice %27 {offsets = [0, 0], sizes = [16, 32], strides = [1, 1]} : vector<16x96xf32> to vector<16x32xf32>
    %29 = vector.extract_strided_slice %27 {offsets = [0, 32], sizes = [16, 32], strides = [1, 1]} : vector<16x96xf32> to vector<16x32xf32>
    %30 = vector.extract_strided_slice %27 {offsets = [0, 64], sizes = [16, 32], strides = [1, 1]} : vector<16x96xf32> to vector<16x32xf32>
    %31 = vector.extract_strided_slice %25 {offsets = [0, 96], sizes = [16, 32], strides = [1, 1]} : vector<16x192xf32> to vector<16x32xf32>
    %32 = arith.mulf %31, %28 : vector<16x32xf32>
    %c0_15 = arith.constant 0 : index
    %c0_16 = arith.constant 0 : index
    %c0_17 = arith.constant 0 : index
    %33 = vector.load %arg3[%c0_15, %c0_16, %c0_17] : memref<3x16x1xf32, #tpu.memory_space<vmem>>, vector<1x16x1xf32>
    %34 = vector.shape_cast %33 : vector<1x16x1xf32> to vector<16x1xf32>
    %35 = vector.broadcast %34 : vector<16x1xf32> to vector<16x32xf32>
    %36 = arith.mulf %30, %35 : vector<16x32xf32>
    %37 = arith.addf %32, %36 : vector<16x32xf32>
    %38 = vector.extract_strided_slice %25 {offsets = [0, 128], sizes = [16, 32], strides = [1, 1]} : vector<16x192xf32> to vector<16x32xf32>
    %39 = arith.mulf %38, %28 : vector<16x32xf32>
    %c1 = arith.constant 1 : index
    %c0_18 = arith.constant 0 : index
    %c0_19 = arith.constant 0 : index
    %40 = vector.load %arg3[%c1, %c0_18, %c0_19] : memref<3x16x1xf32, #tpu.memory_space<vmem>>, vector<1x16x1xf32>
    %41 = vector.shape_cast %40 : vector<1x16x1xf32> to vector<16x1xf32>
    %42 = vector.broadcast %41 : vector<16x1xf32> to vector<16x32xf32>
    %43 = arith.mulf %30, %42 : vector<16x32xf32>
    %44 = arith.addf %39, %43 : vector<16x32xf32>
    %45 = vector.extract_strided_slice %25 {offsets = [0, 160], sizes = [16, 32], strides = [1, 1]} : vector<16x192xf32> to vector<16x32xf32>
    %46 = arith.mulf %45, %28 : vector<16x32xf32>
    %c2 = arith.constant 2 : index
    %c0_20 = arith.constant 0 : index
    %c0_21 = arith.constant 0 : index
    %47 = vector.load %arg3[%c2, %c0_20, %c0_21] : memref<3x16x1xf32, #tpu.memory_space<vmem>>, vector<1x16x1xf32>
    %48 = vector.shape_cast %47 : vector<1x16x1xf32> to vector<16x1xf32>
    %49 = vector.broadcast %48 : vector<16x1xf32> to vector<16x32xf32>
    %50 = arith.mulf %30, %49 : vector<16x32xf32>
    %51 = arith.addf %46, %50 : vector<16x32xf32>
    %52 = tpu.concatenate %29, %37, %44, %51 in 1 : vector<16x32xf32>, vector<16x32xf32>, vector<16x32xf32>, vector<16x32xf32> -> vector<16x128xf32>
    %c0_22 = arith.constant 0 : index
    %c0_23 = arith.constant 0 : index
    %53 = vector.load %arg13[%c0_22, %c0_23] : memref<8x128xf32, #tpu.memory_space<vmem>>, vector<8x128xf32>
    %cst_24 = arith.constant dense<0.000000e+00> : vector<8x128xf32>
    %54 = tpu.matmul %23, %52, %cst_24 {dimension_numbers = #tpu.dot_dimension_numbers<[1], [0], [0], [1], [0, 0, 1, 1], [], []>} : vector<8x16xf32>, vector<16x128xf32>, vector<8x128xf32> -> vector<8x128xf32>
    %55 = arith.addf %53, %54 : vector<8x128xf32>
    %c0_25 = arith.constant 0 : index
    %c0_26 = arith.constant 0 : index
    %56 = vector.load %arg13[%c0_25, %c0_26] : memref<8x128xf32, #tpu.memory_space<vmem>>, vector<8x128xf32>
    tpu.vector_store %arg13[%c0_25, %c0_26], %55 {strides = array<i32>} : memref<8x128xf32, #tpu.memory_space<vmem>>, vector<8x128xf32>,
    %c0_27 = arith.constant 0 : index
    %c0_28 = arith.constant 0 : index
    %57 = vector.load %arg15[%c0_27, %c0_28] : memref<8x1xf32, #tpu.memory_space<vmem>>, vector<8x1xf32>
    %cst_29 = arith.constant dense<0.000000e+00> : vector<8xf32>
    %58 = vector.multi_reduction <add>, %23, %cst_29 [1] : vector<8x16xf32> to vector<8xf32>
    %59 = vector.shape_cast %58 : vector<8xf32> to vector<8x1xf32>
    %60 = arith.addf %57, %59 : vector<8x1xf32>
    %c0_30 = arith.constant 0 : index
    %c0_31 = arith.constant 0 : index
    %61 = vector.load %arg15[%c0_30, %c0_31] : memref<8x1xf32, #tpu.memory_space<vmem>>, vector<8x1xf32>
    tpu.vector_store %arg15[%c0_30, %c0_31], %60 {strides = array<i32>} : memref<8x1xf32, #tpu.memory_space<vmem>>, vector<8x1xf32>,
    %c0_i32_32 = arith.constant 0 : i32
    %62 = arith.cmpi eq, %arg0, %c0_i32_32 : i32
    %63 = arith.extui %62 : i1 to i32
    %c0_i32_33 = arith.constant 0 : i32
    %64 = arith.cmpi ne, %63, %c0_i32_33 : i32
    scf.if %64 {
      %c0_34 = arith.constant 0 : index
      %c0_35 = arith.constant 0 : index
      %65 = vector.load %arg15[%c0_34, %c0_35] : memref<8x1xf32, #tpu.memory_space<vmem>>, vector<8x1xf32>
      %cst_36 = arith.constant 1.000000e+00 : f32
      %66 = vector.broadcast %cst_36 : f32 to vector<8x1xf32>
      %67 = arith.divf %66, %65 : vector<8x1xf32>
      %c0_37 = arith.constant 0 : index
      %c0_38 = arith.constant 0 : index
      %68 = vector.load %arg6[%c0_37, %c0_38] : memref<8x128xf32, #tpu.memory_space<vmem>>, vector<8x128xf32>
      %c0_39 = arith.constant 0 : index
      %c0_40 = arith.constant 0 : index
      %69 = vector.load %arg13[%c0_39, %c0_40] : memref<8x128xf32, #tpu.memory_space<vmem>>, vector<8x128xf32>
      %70 = vector.broadcast %67 : vector<8x1xf32> to vector<8x128xf32>
      %71 = arith.mulf %69, %70 : vector<8x128xf32>
      %72 = arith.addf %68, %71 : vector<8x128xf32>
      %c0_41 = arith.constant 0 : index
      %c0_42 = arith.constant 0 : index
      %73 = vector.load %arg13[%c0_41, %c0_42] : memref<8x128xf32, #tpu.memory_space<vmem>>, vector<8x128xf32>
      tpu.vector_store %arg13[%c0_41, %c0_42], %72 {strides = array<i32>} : memref<8x128xf32, #tpu.memory_space<vmem>>, vector<8x128xf32>,
    } else {
    }
    return
  }
  func.func @transform_0(%arg0: i32) -> (i32, i32) {
    %c0_i32 = arith.constant 0 : i32
    %c0_i32_0 = arith.constant 0 : i32
    return %c0_i32, %arg0 : i32, i32
  }
  func.func @transform_1(%arg0: i32) -> (i32, i32) {
    %c0_i32 = arith.constant 0 : i32
    %c0_i32_0 = arith.constant 0 : i32
    return %arg0, %c0_i32 : i32, i32
  }
  func.func @transform_2(%arg0: i32) -> (i32, i32, i32) {
    %c0_i32 = arith.constant 0 : i32
    %c0_i32_0 = arith.constant 0 : i32
    %c0_i32_1 = arith.constant 0 : i32
    return %c0_i32, %arg0, %c0_i32_0 : i32, i32, i32
  }
  func.func @transform_3(%arg0: i32) -> (i32, i32) {
    %c0_i32 = arith.constant 0 : i32
    %c0_i32_0 = arith.constant 0 : i32
    return %arg0, %c0_i32 : i32, i32
  }
  func.func @transform_4(%arg0: i32) -> (i32, i32) {
    %c0_i32 = arith.constant 0 : i32
    %c0_i32_0 = arith.constant 0 : i32
    return %arg0, %c0_i32 : i32, i32
  }
  func.func @transform_5(%arg0: i32) -> (i32, i32) {
    %c0_i32 = arith.constant 0 : i32
    %c0_i32_0 = arith.constant 0 : i32
    %c0_i32_1 = arith.constant 0 : i32
    return %c0_i32, %c0_i32_0 : i32, i32
  }
  func.func @transform_6(%arg0: i32) -> (i32, i32) {
    %c0_i32 = arith.constant 0 : i32
    %c0_i32_0 = arith.constant 0 : i32
    %c0_i32_1 = arith.constant 0 : i32
    return %c0_i32, %c0_i32_0 : i32, i32
  }
  func.func @transform_7(%arg0: i32) -> (i32, i32) {
    %c0_i32 = arith.constant 0 : i32
    %c0_i32_0 = arith.constant 0 : i32
    %c0_i32_1 = arith.constant 0 : i32
    return %c0_i32, %c0_i32_0 : i32, i32
  }
  func.func @transform_8(%arg0: i32) -> (i32, i32) {
    %c0_i32 = arith.constant 0 : i32
    %c0_i32_0 = arith.constant 0 : i32
    %c0_i32_1 = arith.constant 0 : i32
    return %c0_i32, %c0_i32_0 : i32, i32
  }
  func.func @transform_9(%arg0: i32) -> (i32, i32) {
    %c0_i32 = arith.constant 0 : i32
    %c0_i32_0 = arith.constant 0 : i32
    %c0_i32_1 = arith.constant 0 : i32
    return %c0_i32, %c0_i32_0 : i32, i32
  }
  func.func @transform_10(%arg0: i32) -> (i32, i32) {
    %c0_i32 = arith.constant 0 : i32
    %c0_i32_0 = arith.constant 0 : i32
    %c0_i32_1 = arith.constant 0 : i32
    return %c0_i32, %c0_i32_0 : i32, i32
  }
  func.func @transform_11(%arg0: i32) -> (i32, i32) {
    %c0_i32 = arith.constant 0 : i32
    %c0_i32_0 = arith.constant 0 : i32
    %c0_i32_1 = arith.constant 0 : i32
    return %c0_i32, %c0_i32_0 : i32, i32
  }
  func.func @transform_12(%arg0: i32) -> (i32, i32) {
    %c0_i32 = arith.constant 0 : i32
    %c0_i32_0 = arith.constant 0 : i32
    %c0_i32_1 = arith.constant 0 : i32
    return %c0_i32, %c0_i32_0 : i32, i32
  }
}

</mosaic_0001>

<llo_original>
// kernel: tpu_custom_call.1
$region0: #{tpu_custom_call.1}
  #allocation0 [shape = 'u32[]', space=smem, size = 0x4, offset = 0x4, fixed_abs, tag = 'smem constant byte address 0x4 - core index']
  #allocation1 [shape = 'u32[144,128]{1,0:T(1,128)}', space=vmem, size = 0x12000, scoped, tag = 'internal scratch']
  #allocation2 [shape = 'f32[8,192]{1,0:T(8,128)}', space=vmem, size = 0x2000, scoped, tag = 'scratch operand']
  #allocation3 [shape = 'f32[8,1]{1,0:T(8,128)}', space=vmem, size = 0x1000, scoped, tag = 'scratch operand']
  %s0 = inlined_call_operand.hbm [shape: s32[1,16], index: 0, kind: input, shape index: {}]
  %s1 = inlined_call_operand.vmem [shape: s32[16,1], index: 1, kind: input, shape index: {}]
  %s2 = inlined_call_operand.vmem [shape: f32[3,16,1], index: 2, kind: input, shape index: {}]
  %s3 = inlined_call_operand.vmem [shape: f32[16,1], index: 3, kind: input, shape index: {}]
  %s4 = inlined_call_operand.vmem [shape: f32[16,16], index: 4, kind: input, shape index: {}]
  %s5 = inlined_call_operand.hbm [shape: f32[8,128], index: 5, kind: input, shape index: {}]
  %s6 = inlined_call_operand.vmem [shape: f32[32,32], index: 6, kind: input, shape index: {}]
  %s7 = inlined_call_operand.vmem [shape: f32[1,32], index: 7, kind: input, shape index: {}]
  %s8 = inlined_call_operand.vmem [shape: f32[32,96], index: 8, kind: input, shape index: {}]
  %s9 = inlined_call_operand.vmem [shape: f32[1,96], index: 9, kind: input, shape index: {}]
  %s10 = inlined_call_operand.vmem [shape: f32[16,96], index: 10, kind: input, shape index: {}]
  %s11 = inlined_call_operand.vmem [shape: f32[1,96], index: 11, kind: input, shape index: {}]
  %s12 = inlined_call_operand.hbm [shape: f32[8,128], index: 12, kind: output, shape index: {}]
  %s13 = sld [smem:[#allocation0]]
  $region74: #{tpu_custom_call.1} parent=0
    _
  %s15 = ssub.s32 1, %s13
  %s16 = scalar_select 0, %s15, %s13
  $region1: #{tpu_custom_call.1} parent=0
    #allocation4 [shape = 'u8[512]{0}', space=vmem, size = 0x400, scoped, tag = 'input window, operand 0, single buffered']
    #allocation5 [shape = 's32[1]{0}', space=sflag, size = 0x4, scoped, tag = 'scoped memory for tpu_custom_call.1']
    #allocation6 [shape = 's32[1]{0}', space=sflag, size = 0x4, scoped, tag = 'scoped memory for tpu_custom_call.1']
    #allocation7 [shape = 'u8[4096]{0}', space=vmem, size = 0x1000, scoped, tag = 'input window, operand 5, single buffered']
    #allocation8 [shape = 's32[1]{0}', space=sflag, size = 0x4, scoped, tag = 'scoped memory for tpu_custom_call.1']
    #allocation9 [shape = 'u8[4096]{0}', space=vmem, size = 0x1000, scoped, tag = 'output window, operand 0, single buffered']
    %17 = vsyncpa [#allocation5], 0
    %18 = vsyncpa [#allocation8], 0
    %19 = vsyncpa [#allocation6], 0
    // Predicated region
    $region2: #{tpu_custom_call.1} parent=1 // pred_check
      _
    $region3: #{tpu_custom_call.1} parent=1 // pred_check_branch
      %21 = sbr.rel (0) target = $region5
    $region4: #{tpu_custom_call.1} parent=1 // pred_region
      %s23 = ssub.s32 16, 16
      %24 = vsyncadd [#allocation5], %s23
      %s26 = sshll.u32 [#allocation4], 4
      %s27 = int_to_ptr.vmem [resolvable:$true] %s26
      %29 = dma.hbm_to_vmem [thread:$0]  %s0, 16, %s27, [#allocation5]
    $region5: #{tpu_custom_call.1} parent=1 // pred_fallthru
      _
    // Predicated region
    $region6: #{tpu_custom_call.1} parent=1 // pred_check
      _
    $region7: #{tpu_custom_call.1} parent=1 // pred_check_branch
      %31 = sbr.rel (0) target = $region9
    $region8: #{tpu_custom_call.1} parent=1 // pred_region
      _
    $region9: #{tpu_custom_call.1} parent=1 // pred_fallthru
      _
    // Predicated region
    $region10: #{tpu_custom_call.1} parent=1 // pred_check
      _
    $region11: #{tpu_custom_call.1} parent=1 // pred_check_branch
      %33 = sbr.rel (0) target = $region13
    $region12: #{tpu_custom_call.1} parent=1 // pred_region
      _
    $region13: #{tpu_custom_call.1} parent=1 // pred_fallthru
      _
    // Predicated region
    $region14: #{tpu_custom_call.1} parent=1 // pred_check
      _
    $region15: #{tpu_custom_call.1} parent=1 // pred_check_branch
      %35 = sbr.rel (0) target = $region17
    $region16: #{tpu_custom_call.1} parent=1 // pred_region
      _
    $region17: #{tpu_custom_call.1} parent=1 // pred_fallthru
      _
    // Predicated region
    $region18: #{tpu_custom_call.1} parent=1 // pred_check
      _
    $region19: #{tpu_custom_call.1} parent=1 // pred_check_branch
      %37 = sbr.rel (0) target = $region21
    $region20: #{tpu_custom_call.1} parent=1 // pred_region
      _
    $region21: #{tpu_custom_call.1} parent=1 // pred_fallthru
      _
    // Predicated region
    $region22: #{tpu_custom_call.1} parent=1 // pred_check
      _
    $region23: #{tpu_custom_call.1} parent=1 // pred_check_branch
      %39 = sbr.rel (0) target = $region25
    $region24: #{tpu_custom_call.1} parent=1 // pred_region
      %s41 = ssub.s32 128, 128
      %42 = vsyncadd [#allocation8], %s41
      %s44 = sshll.u32 [#allocation7], 4
      %s45 = int_to_ptr.vmem [resolvable:$true] %s44
      %47 = dma.hbm_to_vmem [thread:$0]  %s5, 128, %s45, [#allocation8]
    $region25: #{tpu_custom_call.1} parent=1 // pred_fallthru
      _
    // Predicated region
    $region26: #{tpu_custom_call.1} parent=1 // pred_check
      _
    $region27: #{tpu_custom_call.1} parent=1 // pred_check_branch
      %49 = sbr.rel (0) target = $region29
    $region28: #{tpu_custom_call.1} parent=1 // pred_region
      _
    $region29: #{tpu_custom_call.1} parent=1 // pred_fallthru
      _
    // Predicated region
    $region30: #{tpu_custom_call.1} parent=1 // pred_check
      _
    $region31: #{tpu_custom_call.1} parent=1 // pred_check_branch
      %51 = sbr.rel (0) target = $region33
    $region32: #{tpu_custom_call.1} parent=1 // pred_region
      _
    $region33: #{tpu_custom_call.1} parent=1 // pred_fallthru
      _
    // Predicated region
    $region34: #{tpu_custom_call.1} parent=1 // pred_check
      _
    $region35: #{tpu_custom_call.1} parent=1 // pred_check_branch
      %53 = sbr.rel (0) target = $region37
    $region36: #{tpu_custom_call.1} parent=1 // pred_region
      _
    $region37: #{tpu_custom_call.1} parent=1 // pred_fallthru
      _
    // Predicated region
    $region38: #{tpu_custom_call.1} parent=1 // pred_check
      _
    $region39: #{tpu_custom_call.1} parent=1 // pred_check_branch
      %55 = sbr.rel (0) target = $region41
    $region40: #{tpu_custom_call.1} parent=1 // pred_region
      _
    $region41: #{tpu_custom_call.1} parent=1 // pred_fallthru
      _
    // Predicated region
    $region42: #{tpu_custom_call.1} parent=1 // pred_check
      _
    $region43: #{tpu_custom_call.1} parent=1 // pred_check_branch
      %57 = sbr.rel (0) target = $region45
    $region44: #{tpu_custom_call.1} parent=1 // pred_region
      _
    $region45: #{tpu_custom_call.1} parent=1 // pred_fallthru
      _
    // Predicated region
    $region46: #{tpu_custom_call.1} parent=1 // pred_check
      _
    $region47: #{tpu_custom_call.1} parent=1 // pred_check_branch
      %59 = sbr.rel (0) target = $region49
    $region48: #{tpu_custom_call.1} parent=1 // pred_region
      _
    $region49: #{tpu_custom_call.1} parent=1 // pred_fallthru
      _
    // Predicated region
    $region50: #{tpu_custom_call.1} parent=1 // pred_check
      _
    $region51: #{tpu_custom_call.1} parent=1 // pred_check_branch
      %61 = sbr.rel (0) target = $region53
    $region52: #{tpu_custom_call.1} parent=1 // pred_region
      %62 = dma.done [#allocation5], 16
    $region53: #{tpu_custom_call.1} parent=1 // pred_fallthru
      _
    // Predicated region
    $region54: #{tpu_custom_call.1} parent=1 // pred_check
      _
    $region55: #{tpu_custom_call.1} parent=1 // pred_check_branch
      %64 = sbr.rel (0) target = $region57
    $region56: #{tpu_custom_call.1} parent=1 // pred_region
      %65 = dma.done [#allocation8], 128
    $region57: #{tpu_custom_call.1} parent=1 // pred_fallthru
      _
    %p66 = scmp.eq.s32.totalorder 0, 0
    // Predicated region
    $region58: #{tpu_custom_call.1} parent=1 // pred_check
      %p67 = pneg %p66
    $region59: #{tpu_custom_call.1} parent=1 // pred_check_branch
      %69 = sbr.rel (%p67) target = $region61
    $region60: #{tpu_custom_call.1} parent=1 // pred_region
      %v70 = vld [vmem:[#allocation7] sm:$0xff]
      %v71 = vld [vmem:[%s6] sm:$0xff]
      %v72 = vld [vmem:[%s6 + $0x8] sm:$0xff]
      %v73 = vld [vmem:[%s6 + $0x10] sm:$0xff]
      %v74 = vld [vmem:[%s6 + $0x18] sm:$0xff]
      %v75 = vld [vmem:[%s7] sm:$0x1]
      %v77 = vlaneseq
      %v78 = vshrl.u32 %v77, 7
      %v79 = vsub.s32 0, %v78
      %v80 = vrot.slane %v75, %v79
      %vm82 = vcmask 261120
      %v84 = vsel %vm82, %v70, 0
      %86 = vmatprep.subr.mxu0 0.0
      %87 = vmatpush1.msra.mxu0 %v71
      %88 = vmatprep.subr.mxu0 0.0
      %89 = vmatpush1.msra.mxu0 %v72
      %90 = vmatprep.subr.mxu0 0.0
      %91 = vmatpush1.msra.mxu0 %v73
      %92 = vmatprep.subr.mxu0 0.0
      %93 = vmatpush1.msra.mxu0 %v74
      %94 = vmatprep.subr.mxu0 0.0
      %95 = vmatpush1.msra.mxu0 0.0
      %96 = vmatprep.subr.mxu0 0.0
      %97 = vmatpush1.msra.mxu0 0.0
      %98 = vmatprep.subr.mxu0 0.0
      %99 = vmatpush1.msra.mxu0 0.0
      %100 = vmatprep.subr.mxu0 0.0
      %101 = vmatpush1.msra.mxu0 0.0
      %102 = vmatprep.subr.mxu0 0.0
      %103 = vmatpush1.msra.mxu0 0.0
      %104 = vmatprep.subr.mxu0 0.0
      %105 = vmatpush1.msra.mxu0 0.0
      %106 = vmatprep.subr.mxu0 0.0
      %107 = vmatpush1.msra.mxu0 0.0
      %108 = vmatprep.subr.mxu0 0.0
      %109 = vmatpush1.msra.mxu0 0.0
      %110 = vmatprep.subr.mxu0 0.0
      %111 = vmatpush1.msra.mxu0 0.0
      %112 = vmatprep.subr.mxu0 0.0
      %113 = vmatpush1.msra.mxu0 0.0
      %114 = vmatprep.subr.mxu0 0.0
      %115 = vmatpush1.msra.mxu0 0.0
      %116 = vmatprep.subr.mxu0 0.0
      %117 = vmatpush1.msra.mxu0 0.0
      %118 = vmatprep.subr.mxu0 0.0
      %119 = vmatpush1.msra.mxu0 0.0
      %120 = vmatprep.subr.mxu0 0.0
      %121 = vmatpush1.msra.mxu0 0.0
      %122 = vmatprep.subr.mxu0 0.0
      %123 = vmatpush1.msra.mxu0 0.0
      %124 = vmatprep.subr.mxu0 0.0
      %125 = vmatpush1.msra.mxu0 0.0
      %126 = vmatprep.subr.mxu0 0.0
      %127 = vmatpush1.msra.mxu0 0.0
      %128 = vmatprep.subr.mxu0 0.0
      %129 = vmatpush1.msra.mxu0 0.0
      %130 = vmatprep.subr.mxu0 0.0
      %131 = vmatpush1.msra.mxu0 0.0
      %132 = vmatprep.subr.mxu0 0.0
      %133 = vmatpush1.msra.mxu0 0.0
      %134 = vmatprep.subr.mxu0 0.0
      %135 = vmatpush1.msra.mxu0 0.0
      %136 = vmatprep.subr.mxu0 0.0
      %137 = vmatpush1.msra.mxu0 0.0
      %138 = vmatprep.subr.mxu0 0.0
      %139 = vmatpush1.msra.mxu0 0.0
      %140 = vmatprep.subr.mxu0 0.0
      %141 = vmatpush1.msra.mxu0 0.0
      %142 = vmatprep.subr.mxu0 0.0
      %143 = vmatpush1.msra.mxu0 0.0
      %144 = vmatprep.subr.mxu0 0.0
      %145 = vmatpush1.msra.mxu0 0.0
      %146 = vmatprep.subr.mxu0 0.0
      %147 = vmatpush1.msra.mxu0 0.0
      %148 = vmatprep.subr.mxu0 0.0
      %149 = vmatpush1.msra.mxu0 0.0
      %150 = vmatprep.mubr.f32.mxu0 0.0
      %151 = vmatmul.mubr.f32.gmra.mrb[0].mxu0 %v84
      %v152 = vpop.f32.mrb[0].mxu0
      %v153 = vadd.f32 %v80, %v152
      %v154 = vpop.f32.mrb[0].mxu0
      %155 = vdwg.mxu0
      %v156 = vxor.u32 %v153, 2147483648
      %v157 = vmul.f32 %v156, 1.442695
      %v158 = vpow.pop %v157
      %v159 = vadd.f32 %v158, 1.0
      %v160 = vrcp.pop %v159
      %v161 = vmul.f32 1.0, %v160
      %v162 = vmul.f32 %v153, %v161
      %v163 = vld [vmem:[%s8] sm:$0xff]
      %v164 = vld [vmem:[%s8 + $0x8] sm:$0xff]
      %v165 = vld [vmem:[%s8 + $0x10] sm:$0xff]
      %v166 = vld [vmem:[%s8 + $0x18] sm:$0xff]
      %v167 = vld [vmem:[%s9] sm:$0x1]
      %v169 = vlaneseq
      %v170 = vshrl.u32 %v169, 7
      %v171 = vsub.s32 0, %v170
      %v172 = vrot.slane %v167, %v171
      %v175 = vsel %vm82, %v162, 0
      %177 = vmatprep.subr.mxu0 0.0
      %178 = vmatpush1.msra.mxu0 %v163
      %179 = vmatprep.subr.mxu0 0.0
      %180 = vmatpush1.msra.mxu0 %v164
      %181 = vmatprep.subr.mxu0 0.0
      %182 = vmatpush1.msra.mxu0 %v165
      %183 = vmatprep.subr.mxu0 0.0
      %184 = vmatpush1.msra.mxu0 %v166
      %185 = vmatprep.subr.mxu0 0.0
      %186 = vmatpush1.msra.mxu0 0.0
      %187 = vmatprep.subr.mxu0 0.0
      %188 = vmatpush1.msra.mxu0 0.0
      %189 = vmatprep.subr.mxu0 0.0
      %190 = vmatpush1.msra.mxu0 0.0
      %191 = vmatprep.subr.mxu0 0.0
      %192 = vmatpush1.msra.mxu0 0.0
      %193 = vmatprep.subr.mxu0 0.0
      %194 = vmatpush1.msra.mxu0 0.0
      %195 = vmatprep.subr.mxu0 0.0
      %196 = vmatpush1.msra.mxu0 0.0
      %197 = vmatprep.subr.mxu0 0.0
      %198 = vmatpush1.msra.mxu0 0.0
      %199 = vmatprep.subr.mxu0 0.0
      %200 = vmatpush1.msra.mxu0 0.0
      %201 = vmatprep.subr.mxu0 0.0
      %202 = vmatpush1.msra.mxu0 0.0
      %203 = vmatprep.subr.mxu0 0.0
      %204 = vmatpush1.msra.mxu0 0.0
      %205 = vmatprep.subr.mxu0 0.0
      %206 = vmatpush1.msra.mxu0 0.0
      %207 = vmatprep.subr.mxu0 0.0
      %208 = vmatpush1.msra.mxu0 0.0
      %209 = vmatprep.subr.mxu0 0.0
      %210 = vmatpush1.msra.mxu0 0.0
      %211 = vmatprep.subr.mxu0 0.0
      %212 = vmatpush1.msra.mxu0 0.0
      %213 = vmatprep.subr.mxu0 0.0
      %214 = vmatpush1.msra.mxu0 0.0
      %215 = vmatprep.subr.mxu0 0.0
      %216 = vmatpush1.msra.mxu0 0.0
      %217 = vmatprep.subr.mxu0 0.0
      %218 = vmatpush1.msra.mxu0 0.0
      %219 = vmatprep.subr.mxu0 0.0
      %220 = vmatpush1.msra.mxu0 0.0
      %221 = vmatprep.subr.mxu0 0.0
      %222 = vmatpush1.msra.mxu0 0.0
      %223 = vmatprep.subr.mxu0 0.0
      %224 = vmatpush1.msra.mxu0 0.0
      %225 = vmatprep.subr.mxu0 0.0
      %226 = vmatpush1.msra.mxu0 0.0
      %227 = vmatprep.subr.mxu0 0.0
      %228 = vmatpush1.msra.mxu0 0.0
      %229 = vmatprep.subr.mxu0 0.0
      %230 = vmatpush1.msra.mxu0 0.0
      %231 = vmatprep.subr.mxu0 0.0
      %232 = vmatpush1.msra.mxu0 0.0
      %233 = vmatprep.subr.mxu0 0.0
      %234 = vmatpush1.msra.mxu0 0.0
      %235 = vmatprep.subr.mxu0 0.0
      %236 = vmatpush1.msra.mxu0 0.0
      %237 = vmatprep.subr.mxu0 0.0
      %238 = vmatpush1.msra.mxu0 0.0
      %239 = vmatprep.subr.mxu0 0.0
      %240 = vmatpush1.msra.mxu0 0.0
      %241 = vmatprep.mubr.f32.mxu0 0.0
      %242 = vmatmul.mubr.f32.gmra.mrb[0].mxu0 %v175
      %v243 = vpop.f32.mrb[0].mxu0
      %v244 = vadd.f32 %v172, %v243
      %v245 = vpop.f32.mrb[0].mxu0
      %246 = vdwg.mxu0
      %247 = vrot.lane.b32.xlu0 %v70, 64
      %v248 = vpop.permute.xlu0 %247
      %vm250 = vcmask 785408
      %v251 = vsel %vm250, %v244, %v248
      %252 = vst [vmem:[#allocation2] sm:$0xff] %v251
      %vm253 = vcmask 523264
      %254 = vst.msk [vmem:[#allocation2 + $0x8] sm:$0xff] %vm253, %v248
      %255 = vst [vmem:[#allocation9] sm:$0xff] 0.0
      %vm256 = vcmask 7168
      %257 = vst.msk [vmem:[#allocation3] sm:$0xff] %vm256, 0.0
    $region61: #{tpu_custom_call.1} parent=1 // pred_fallthru
      _
    %v258 = vld [vmem:[%s4] sm:$0xff]
    %v259 = vld [vmem:[%s4 + $0x8] sm:$0xff]
    %v260 = vld [vmem:[%s10] sm:$0xff]
    %v261 = vld [vmem:[%s10 + $0x8] sm:$0xff]
    %v262 = vld [vmem:[%s11] sm:$0x1]
    %v264 = vlaneseq
    %v265 = vshrl.u32 %v264, 7
    %v266 = vsub.s32 0, %v265
    %v267 = vrot.slane %v262, %v266
    %vm269 = vcmask 130048
    %v271 = vsel %vm269, %v258, 0
    %v274 = vsel %vm269, %v259, 0
    %276 = vmatprep.subr.mxu0 0.0
    %277 = vmatpush1.msra.mxu0 %v260
    %278 = vmatprep.subr.mxu0 0.0
    %279 = vmatpush1.msra.mxu0 %v261
    %280 = vmatprep.subr.mxu0 0.0
    %281 = vmatpush1.msra.mxu0 0.0
    %282 = vmatprep.subr.mxu0 0.0
    %283 = vmatpush1.msra.mxu0 0.0
    %284 = vmatprep.subr.mxu0 0.0
    %285 = vmatpush1.msra.mxu0 0.0
    %286 = vmatprep.subr.mxu0 0.0
    %287 = vmatpush1.msra.mxu0 0.0
    %288 = vmatprep.subr.mxu0 0.0
    %289 = vmatpush1.msra.mxu0 0.0
    %290 = vmatprep.subr.mxu0 0.0
    %291 = vmatpush1.msra.mxu0 0.0
    %292 = vmatprep.subr.mxu0 0.0
    %293 = vmatpush1.msra.mxu0 0.0
    %294 = vmatprep.subr.mxu0 0.0
    %295 = vmatpush1.msra.mxu0 0.0
    %296 = vmatprep.subr.mxu0 0.0
    %297 = vmatpush1.msra.mxu0 0.0
    %298 = vmatprep.subr.mxu0 0.0
    %299 = vmatpush1.msra.mxu0 0.0
    %300 = vmatprep.subr.mxu0 0.0
    %301 = vmatpush1.msra.mxu0 0.0
    %302 = vmatprep.subr.mxu0 0.0
    %303 = vmatpush1.msra.mxu0 0.0
    %304 = vmatprep.subr.mxu0 0.0
    %305 = vmatpush1.msra.mxu0 0.0
    %306 = vmatprep.subr.mxu0 0.0
    %307 = vmatpush1.msra.mxu0 0.0
    %308 = vmatprep.subr.mxu0 0.0
    %309 = vmatpush1.msra.mxu0 0.0
    %310 = vmatprep.subr.mxu0 0.0
    %311 = vmatpush1.msra.mxu0 0.0
    %312 = vmatprep.subr.mxu0 0.0
    %313 = vmatpush1.msra.mxu0 0.0
    %314 = vmatprep.subr.mxu0 0.0
    %315 = vmatpush1.msra.mxu0 0.0
    %316 = vmatprep.subr.mxu0 0.0
    %317 = vmatpush1.msra.mxu0 0.0
    %318 = vmatprep.subr.mxu0 0.0
    %319 = vmatpush1.msra.mxu0 0.0
    %320 = vmatprep.subr.mxu0 0.0
    %321 = vmatpush1.msra.mxu0 0.0
    %322 = vmatprep.subr.mxu0 0.0
    %323 = vmatpush1.msra.mxu0 0.0
    %324 = vmatprep.subr.mxu0 0.0
    %325 = vmatpush1.msra.mxu0 0.0
    %326 = vmatprep.subr.mxu0 0.0
    %327 = vmatpush1.msra.mxu0 0.0
    %328 = vmatprep.subr.mxu0 0.0
    %329 = vmatpush1.msra.mxu0 0.0
    %330 = vmatprep.subr.mxu0 0.0
    %331 = vmatpush1.msra.mxu0 0.0
    %332 = vmatprep.subr.mxu0 0.0
    %333 = vmatpush1.msra.mxu0 0.0
    %334 = vmatprep.subr.mxu0 0.0
    %335 = vmatpush1.msra.mxu0 0.0
    %336 = vmatprep.subr.mxu0 0.0
    %337 = vmatpush1.msra.mxu0 0.0
    %338 = vmatprep.subr.mxu0 0.0
    %339 = vmatpush1.msra.mxu0 0.0
    %340 = vmatprep.mubr.f32.mxu0 0.0
    %341 = vmatmul.mubr.f32.gmra.mrb[0].mxu0 %v271
    %v342 = vpop.f32.mrb[0].mxu0
    %v343 = vadd.f32 %v267, %v342
    %v344 = vpop.f32.mrb[0].mxu0
    %345 = vmatprep.mubr.f32.mxu0 0.0
    %346 = vmatmul.mubr.f32.gmra.mrb[0].mxu0 %v274
    %v347 = vpop.f32.mrb[0].mxu0
    %v348 = vadd.f32 %v267, %v347
    %v349 = vpop.f32.mrb[0].mxu0
    %350 = vdwg.mxu0
    %v351 = vld [vmem:[%s3] sm:$0xff]
    %v352 = vld [vmem:[%s3 + $0x8] sm:$0xff]
    %354 = vset.pattern.permute.xlu0 0
    %355 = vperm.xlu0 %354, %v351
    %v356 = vpop.permute.xlu0 %355
    %359 = vset.pattern.permute.xlu0 0
    %360 = vperm.xlu0 %359, %v352
    %v361 = vpop.permute.xlu0 %360
    %v363 = vmul.f32 %v343, %v356
    %v364 = vmul.f32 %v348, %v361
    %v365 = vlaneseq
    %v366 = vand.u32 %v365, 127
    %v367 = vld [vmem:[%s1] sm:$0xff]
    %v368 = vld [vmem:[%s1 + $0x8] sm:$0xff]
    %369 = vset.pattern.permute.xlu0 0
    %370 = vperm.xlu0 %369, %v367
    %v371 = vpop.permute.xlu0 %370
    %372 = vset.pattern.permute.xlu0 0
    %373 = vperm.xlu0 %372, %v368
    %v374 = vpop.permute.xlu0 %373
    %vm375 = vcmp.eq.s32.totalorder %v366, %v371
    %vm376 = vcmp.eq.s32.totalorder %v366, %v374
    %v377 = vlaneseq
    %v378 = vshrl.u32 %v377, 7
    %v379 = vld [vmem:[#allocation4] sm:$0x1]
    %v380 = vlaneseq
    %v381 = vshrl.u32 %v380, 7
    %v382 = vsub.s32 0, %v381
    %v383 = vrot.slane %v379, %v382
    %vm384 = vcmp.eq.s32.totalorder %v378, %v383
    %v385 = vsel %vm375, 1, 0
    %v386 = vsel %vm376, 1, 0
    %v387 = vcvt.s32.f32 %v385
    %v388 = vcvt.s32.f32 %v386
    %v389 = vsel %vm384, 1, 0
    %v390 = vcvt.s32.f32 %v389
    %v391 = vld [vmem:[#allocation2] sm:$0xff]
    %v392 = vld [vmem:[#allocation2 + $0x8] sm:$0xff]
    %vm393 = vcmask 64512
    %v395 = vsel %vm393, %v387, 0
    %v398 = vsel %vm393, %v388, 0
    %400 = vmatprep.subr.mxu0 %v392
    %401 = vmatpush1.msra.mxu0 %v391
    %402 = vmatprep.subr.mxu0 0.0
    %403 = vmatpush1.msra.mxu0 0.0
    %404 = vmatprep.subr.mxu0 0.0
    %405 = vmatpush1.msra.mxu0 0.0
    %406 = vmatprep.subr.mxu0 0.0
    %407 = vmatpush1.msra.mxu0 0.0
    %408 = vmatprep.subr.mxu0 0.0
    %409 = vmatpush1.msra.mxu0 0.0
    %410 = vmatprep.subr.mxu0 0.0
    %411 = vmatpush1.msra.mxu0 0.0
    %412 = vmatprep.subr.mxu0 0.0
    %413 = vmatpush1.msra.mxu0 0.0
    %414 = vmatprep.subr.mxu0 0.0
    %415 = vmatpush1.msra.mxu0 0.0
    %416 = vmatprep.subr.mxu0 0.0
    %417 = vmatpush1.msra.mxu0 0.0
    %418 = vmatprep.subr.mxu0 0.0
    %419 = vmatpush1.msra.mxu0 0.0
    %420 = vmatprep.subr.mxu0 0.0
    %421 = vmatpush1.msra.mxu0 0.0
    %422 = vmatprep.subr.mxu0 0.0
    %423 = vmatpush1.msra.mxu0 0.0
    %424 = vmatprep.subr.mxu0 0.0
    %425 = vmatpush1.msra.mxu0 0.0
    %426 = vmatprep.subr.mxu0 0.0
    %427 = vmatpush1.msra.mxu0 0.0
    %428 = vmatprep.subr.mxu0 0.0
    %429 = vmatpush1.msra.mxu0 0.0
    %430 = vmatprep.subr.mxu0 0.0
    %431 = vmatpush1.msra.mxu0 0.0
    %432 = vmatprep.subr.mxu0 0.0
    %433 = vmatpush1.msra.mxu0 0.0
    %434 = vmatprep.subr.mxu0 0.0
    %435 = vmatpush1.msra.mxu0 0.0
    %436 = vmatprep.subr.mxu0 0.0
    %437 = vmatpush1.msra.mxu0 0.0
    %438 = vmatprep.subr.mxu0 0.0
    %439 = vmatpush1.msra.mxu0 0.0
    %440 = vmatprep.subr.mxu0 0.0
    %441 = vmatpush1.msra.mxu0 0.0
    %442 = vmatprep.subr.mxu0 0.0
    %443 = vmatpush1.msra.mxu0 0.0
    %444 = vmatprep.subr.mxu0 0.0
    %445 = vmatpush1.msra.mxu0 0.0
    %446 = vmatprep.subr.mxu0 0.0
    %447 = vmatpush1.msra.mxu0 0.0
    %448 = vmatprep.subr.mxu0 0.0
    %449 = vmatpush1.msra.mxu0 0.0
    %450 = vmatprep.subr.mxu0 0.0
    %451 = vmatpush1.msra.mxu0 0.0
    %452 = vmatprep.subr.mxu0 0.0
    %453 = vmatpush1.msra.mxu0 0.0
    %454 = vmatprep.subr.mxu0 0.0
    %455 = vmatpush1.msra.mxu0 0.0
    %456 = vmatprep.subr.mxu0 0.0
    %457 = vmatpush1.msra.mxu0 0.0
    %458 = vmatprep.subr.mxu0 0.0
    %459 = vmatpush1.msra.mxu0 0.0
    %460 = vmatprep.subr.mxu0 0.0
    %461 = vmatpush1.msra.mxu0 0.0
    %462 = vmatprep.subr.mxu0 0.0
    %463 = vmatpush1.msra.mxu0 0.0
    %464 = vmatprep.mubr.f32.mxu0 0.0
    %465 = vmatmul.mubr.f32.gmra.mrb[0].mxu0 %v395
    %v466 = vpop.f32.mrb[0].mxu0
    %v467 = vadd.f32 0.0, %v466
    %v468 = vpop.f32.mrb[0].mxu0
    %v469 = vadd.f32 0.0, %v468
    %470 = vmatprep.mubr.f32.mxu0 0.0
    %471 = vmatmul.mubr.f32.gmra.mrb[0].mxu0 %v398
    %v472 = vpop.f32.mrb[0].mxu0
    %v473 = vadd.f32 0.0, %v472
    %v474 = vpop.f32.mrb[0].mxu0
    %v475 = vadd.f32 0.0, %v474
    %476 = vdwg.mxu0
    %v477 = vmul.f32 %v467, %v363
    %v478 = vmul.f32 %v473, %v364
    %481 = vrot.lane.b32.xlu0 %v477, 96
    %v482 = vpop.permute.xlu0 %481
    %483 = vrot.lane.b32.xlu0 %v478, 96
    %v484 = vpop.permute.xlu0 %483
    %v487 = vmul.f32 %v467, %v482
    %v488 = vmul.f32 %v473, %v484
    %v489 = vld [vmem:[%s2] sm:$0xff]
    %v490 = vld [vmem:[%s2 + $0x8] sm:$0xff]
    %492 = vset.pattern.permute.xlu0 0
    %493 = vperm.xlu0 %492, %v489
    %v494 = vpop.permute.xlu0 %493
    %497 = vset.pattern.permute.xlu0 0
    %498 = vperm.xlu0 %497, %v490
    %v499 = vpop.permute.xlu0 %498
    %v501 = vmul.f32 %v477, %v494
    %v502 = vmul.f32 %v478, %v499
    %505 = vrot.lane.b32.xlu0 %v501, 32
    %v506 = vpop.permute.xlu0 %505
    %507 = vrot.lane.b32.xlu0 %v502, 32
    %v508 = vpop.permute.xlu0 %507
    %v511 = vadd.f32 %v487, %v506
    %v512 = vadd.f32 %v488, %v508
    %v513 = vmul.f32 %v469, %v477
    %v514 = vmul.f32 %v475, %v478
    %s515 = scalar_lea.vmem %s2, 16
    %v516 = vld [vmem:[%s515] sm:$0xff]
    %v517 = vld [vmem:[%s515 + $0x8] sm:$0xff]
    %519 = vset.pattern.permute.xlu0 0
    %520 = vperm.xlu0 %519, %v516
    %v521 = vpop.permute.xlu0 %520
    %524 = vset.pattern.permute.xlu0 0
    %525 = vperm.xlu0 %524, %v517
    %v526 = vpop.permute.xlu0 %525
    %v528 = vmul.f32 %v477, %v521
    %v529 = vmul.f32 %v478, %v526
    %532 = vrot.lane.b32.xlu0 %v528, 64
    %v533 = vpop.permute.xlu0 %532
    %534 = vrot.lane.b32.xlu0 %v529, 64
    %v535 = vpop.permute.xlu0 %534
    %v538 = vadd.f32 %v513, %v533
    %v539 = vadd.f32 %v514, %v535
    %540 = vrot.lane.b32.xlu0 %v477, 32
    %v541 = vpop.permute.xlu0 %540
    %542 = vrot.lane.b32.xlu0 %v478, 32
    %v543 = vpop.permute.xlu0 %542
    %v546 = vmul.f32 %v469, %v541
    %v547 = vmul.f32 %v475, %v543
    %s548 = scalar_lea.vmem %s2, 32
    %v549 = vld [vmem:[%s548] sm:$0xff]
    %v550 = vld [vmem:[%s548 + $0x8] sm:$0xff]
    %552 = vset.pattern.permute.xlu0 0
    %553 = vperm.xlu0 %552, %v549
    %v554 = vpop.permute.xlu0 %553
    %557 = vset.pattern.permute.xlu0 0
    %558 = vperm.xlu0 %557, %v550
    %v559 = vpop.permute.xlu0 %558
    %v561 = vmul.f32 %v477, %v554
    %v562 = vmul.f32 %v478, %v559
    %565 = vrot.lane.b32.xlu0 %v561, 96
    %v566 = vpop.permute.xlu0 %565
    %567 = vrot.lane.b32.xlu0 %v562, 96
    %v568 = vpop.permute.xlu0 %567
    %v571 = vadd.f32 %v546, %v566
    %v572 = vadd.f32 %v547, %v568
    %575 = vrot.lane.b32.xlu0 %v511, 64
    %v576 = vpop.permute.xlu0 %575
    %577 = vrot.lane.b32.xlu0 %v512, 64
    %v578 = vpop.permute.xlu0 %577
    %583 = vrot.lane.b32.xlu0 %v538, 64
    %v584 = vpop.permute.xlu0 %583
    %585 = vrot.lane.b32.xlu0 %v539, 64
    %v586 = vpop.permute.xlu0 %585
    %591 = vrot.lane.b32.xlu0 %v571, 64
    %v592 = vpop.permute.xlu0 %591
    %593 = vrot.lane.b32.xlu0 %v572, 64
    %v594 = vpop.permute.xlu0 %593
    %vm597 = vcmask 261120
    %v598 = vsel %vm597, %v482, %v576
    %v599 = vsel %vm597, %v484, %v578
    %vm600 = vcmask 523264
    %v601 = vsel %vm600, %v598, %v584
    %v602 = vsel %vm600, %v599, %v586
    %vm603 = vcmask 785408
    %v604 = vsel %vm603, %v601, %v592
    %v605 = vsel %vm603, %v602, %v594
    %v606 = vld [vmem:[#allocation9] sm:$0xff]
    %v608 = vsel %vm269, %v390, 0
    %610 = vmatprep.subr.mxu0 0.0
    %611 = vmatpush1.msra.mxu0 %v604
    %612 = vmatprep.subr.mxu0 0.0
    %613 = vmatpush1.msra.mxu0 %v605
    %614 = vmatprep.subr.mxu0 0.0
    %615 = vmatpush1.msra.mxu0 0.0
    %616 = vmatprep.subr.mxu0 0.0
    %617 = vmatpush1.msra.mxu0 0.0
    %618 = vmatprep.subr.mxu0 0.0
    %619 = vmatpush1.msra.mxu0 0.0
    %620 = vmatprep.subr.mxu0 0.0
    %621 = vmatpush1.msra.mxu0 0.0
    %622 = vmatprep.subr.mxu0 0.0
    %623 = vmatpush1.msra.mxu0 0.0
    %624 = vmatprep.subr.mxu0 0.0
    %625 = vmatpush1.msra.mxu0 0.0
    %626 = vmatprep.subr.mxu0 0.0
    %627 = vmatpush1.msra.mxu0 0.0
    %628 = vmatprep.subr.mxu0 0.0
    %629 = vmatpush1.msra.mxu0 0.0
    %630 = vmatprep.subr.mxu0 0.0
    %631 = vmatpush1.msra.mxu0 0.0
    %632 = vmatprep.subr.mxu0 0.0
    %633 = vmatpush1.msra.mxu0 0.0
    %634 = vmatprep.subr.mxu0 0.0
    %635 = vmatpush1.msra.mxu0 0.0
    %636 = vmatprep.subr.mxu0 0.0
    %637 = vmatpush1.msra.mxu0 0.0
    %638 = vmatprep.subr.mxu0 0.0
    %639 = vmatpush1.msra.mxu0 0.0
    %640 = vmatprep.subr.mxu0 0.0
    %641 = vmatpush1.msra.mxu0 0.0
    %642 = vmatprep.subr.mxu0 0.0
    %643 = vmatpush1.msra.mxu0 0.0
    %644 = vmatprep.subr.mxu0 0.0
    %645 = vmatpush1.msra.mxu0 0.0
    %646 = vmatprep.subr.mxu0 0.0
    %647 = vmatpush1.msra.mxu0 0.0
    %648 = vmatprep.subr.mxu0 0.0
    %649 = vmatpush1.msra.mxu0 0.0
    %650 = vmatprep.subr.mxu0 0.0
    %651 = vmatpush1.msra.mxu0 0.0
    %652 = vmatprep.subr.mxu0 0.0
    %653 = vmatpush1.msra.mxu0 0.0
    %654 = vmatprep.subr.mxu0 0.0
    %655 = vmatpush1.msra.mxu0 0.0
    %656 = vmatprep.subr.mxu0 0.0
    %657 = vmatpush1.msra.mxu0 0.0
    %658 = vmatprep.subr.mxu0 0.0
    %659 = vmatpush1.msra.mxu0 0.0
    %660 = vmatprep.subr.mxu0 0.0
    %661 = vmatpush1.msra.mxu0 0.0
    %662 = vmatprep.subr.mxu0 0.0
    %663 = vmatpush1.msra.mxu0 0.0
    %664 = vmatprep.subr.mxu0 0.0
    %665 = vmatpush1.msra.mxu0 0.0
    %666 = vmatprep.subr.mxu0 0.0
    %667 = vmatpush1.msra.mxu0 0.0
    %668 = vmatprep.subr.mxu0 0.0
    %669 = vmatpush1.msra.mxu0 0.0
    %670 = vmatprep.subr.mxu0 0.0
    %671 = vmatpush1.msra.mxu0 0.0
    %672 = vmatprep.subr.mxu0 0.0
    %673 = vmatpush1.msra.mxu0 0.0
    %674 = vmatprep.mubr.f32.mxu0 0.0
    %675 = vmatmul.mubr.f32.gmra.mrb[0].mxu0 %v608
    %v676 = vpop.f32.mrb[0].mxu0
    %v677 = vadd.f32 0.0, %v676
    %v678 = vpop.f32.mrb[0].mxu0
    %679 = vdwg.mxu0
    %v680 = vadd.f32 %v606, %v677
    %681 = vst [vmem:[#allocation9] sm:$0xff] %v680
    %v682 = vld [vmem:[#allocation3] sm:$0xff]
    %v683 = vsel %vm269, %v390, 0.0
    %684 = vadd.xlane.f32.xlu0 %v683
    %v685 = vpop.xlane.xlu0 %684
    %v686 = vadd.f32 %v682, %v685
    %vm687 = vcmask 7168
    %688 = vst.msk [vmem:[#allocation3] sm:$0xff] %vm687, %v686
    // Predicated region
    $region62: #{tpu_custom_call.1} parent=1 // pred_check
      %p689 = pneg %p66
    $region63: #{tpu_custom_call.1} parent=1 // pred_check_branch
      %691 = sbr.rel (%p689) target = $region65
    $region64: #{tpu_custom_call.1} parent=1 // pred_region
      %v692 = vld [vmem:[#allocation3] sm:$0xff]
      %v693 = vrcp.pop %v692
      %v694 = vmul.f32 1.0, %v693
      %v695 = vld [vmem:[#allocation7] sm:$0xff]
      %v696 = vld [vmem:[#allocation9] sm:$0xff]
      %698 = vset.pattern.permute.xlu0 0
      %699 = vperm.xlu0 %698, %v694
      %v700 = vpop.permute.xlu0 %699
      %v702 = vmul.f32 %v696, %v700
      %v703 = vadd.f32 %v695, %v702
      %704 = vst [vmem:[#allocation9] sm:$0xff] %v703
    $region65: #{tpu_custom_call.1} parent=1 // pred_fallthru
      _
    // Predicated region
    $region66: #{tpu_custom_call.1} parent=1 // pred_check
      _
    $region67: #{tpu_custom_call.1} parent=1 // pred_check_branch
      %706 = sbr.rel (0) target = $region69
    $region68: #{tpu_custom_call.1} parent=1 // pred_region
      %s708 = ssub.s32 128, 128
      %709 = vsyncadd [#allocation6], %s708
      %s711 = sshll.u32 [#allocation9], 4
      %s712 = int_to_ptr.vmem [resolvable:$true] %s711
      %714 = dma.vmem_to_hbm [thread:$0]  %s712, 128, %s12, [#allocation6]
    $region69: #{tpu_custom_call.1} parent=1 // pred_fallthru
      _
    // Predicated region
    $region70: #{tpu_custom_call.1} parent=1 // pred_check
      _
    $region71: #{tpu_custom_call.1} parent=1 // pred_check_branch
      %716 = sbr.rel (0) target = $region73
    $region72: #{tpu_custom_call.1} parent=1 // pred_region
      %717 = dma.done [#allocation6], 128
    $region73: #{tpu_custom_call.1} parent=1 // pred_fallthru
      _
    %718 = vsyncpa [#allocation5], 1
    %719 = vsyncpa [#allocation8], 1
    %720 = vsyncpa [#allocation6], 1

</llo_original>
